<compile_context>
chip_gen: v7x
topology: tpu7x:2x2x1
jax: 0.10.0
libtpu: 0.0.40
codegen_flags: <defaults>
</compile_context>

<pallas_src>
import functools
import math

import jax
import jax.numpy as jnp
from jax import lax
from jax.experimental import pallas as pl
from jax.experimental.pallas import tpu as pltpu

KERNEL_SIZE = 5
PAD = (KERNEL_SIZE - 1) // 2          # padding=True in FilterLow
RECURSIONS = 1

_GUARD = 8                            # >= PAD; multiple of 8 keeps the hsum store aligned
_BLOCK_TARGET_BYTES = 4 * 1024 * 1024  # ~4 MiB HBM blocks (fits v7x 64 MiB VMEM x4-buffered)
_CHUNK_ELEMS = 16 * 1024              # ~64 KiB f32 per in-kernel intermediate (~16 vregs)
_MIN_GRID_STEPS = 8                   # keep both v7x TensorCores fed with several steps


def _make_avgpool_kernel(H, W, k, ipc, n_chunks, roll_h, roll_v, guard):
    """Builds the kernel for AvgPool2d(k, stride=1, pad=(k-1)//2, count_include_pad=True).

    Block = `tb` whole images stacked along rows, viewed as (tb*H, W).  Compute
    runs over chunks of `ipc` whole images (Rc = ipc*H rows) so intermediates stay
    small.  Every block/chunk starts at an image boundary (structural invariant).
    """
    pad = (k - 1) // 2
    Rc = ipc * H
    inv = 1.0 / float(k * k)
    pow2_h = (H & (H - 1)) == 0

    def kernel(*refs):
        idx = 0
        band_ref = None
        if not roll_h:
            band_ref = refs[idx]
            idx += 1
        x_ref = refs[idx]
        o_ref = refs[idx + 1]
        idx += 2
        vpad_ref = None if roll_v else refs[idx]

        def row_in_image():
            # Row index within its image; used to mask taps that would cross an
            # image boundary (equivalent to zero padding since divisor stays k*k).
            row = lax.broadcasted_iota(jnp.int32, (Rc, W), 0)
            if ipc == 1:
                return row
            if pow2_h:
                return row & (H - 1)
            # Exact floor-div via f32 (avoids integer div/rem on the VPU).
            q = jnp.floor((row.astype(jnp.float32) + 0.5) * (1.0 / H))
            return row - q.astype(jnp.int32) * H

        def process(r0):
            x = x_ref[pl.ds(r0, Rc), :]

            # ---- horizontal (lane) 5-tap pass --------------------------------
            if roll_h:
                xf = x if x.dtype == jnp.float32 else x.astype(jnp.float32)
                col = lax.broadcasted_iota(jnp.int32, (Rc, W), 1)
                hsum = xf
                for d in range(1, pad + 1):
                    left = pltpu.roll(xf, d, axis=1)        # x[r, j - d]
                    right = pltpu.roll(xf, W - d, axis=1)   # x[r, j + d]
                    hsum = hsum + jnp.where(col >= d, left, 0.0)
                    hsum = hsum + jnp.where(col < W - d, right, 0.0)
            else:
                # Small / unaligned W: banded-ones matmul (band is a tiny resident
                # input; boundary clipping is built into the band).
                lhs = x if x.dtype == band_ref.dtype else x.astype(band_ref.dtype)
                hsum = jnp.dot(lhs, band_ref[...],
                               preferred_element_type=jnp.float32)

            rin = row_in_image()

            # ---- vertical (sublane) 5-tap pass --------------------------------
            vsum = hsum
            if roll_v:
                for d in range(1, pad + 1):
                    up = pltpu.roll(hsum, d, axis=0)          # hsum[r - d]
                    down = pltpu.roll(hsum, Rc - d, axis=0)   # hsum[r + d]
                    vsum = vsum + jnp.where(rin >= d, up, 0.0)
                    vsum = vsum + jnp.where(rin < H - d, down, 0.0)
            else:
                # Guarded VMEM scratch + static sublane slices.  Guard rows are
                # never read unmasked, so they need no initialisation.
                vpad_ref[pl.ds(guard, Rc), :] = hsum
                vp = vpad_ref[...]
                for d in range(1, pad + 1):
                    up = vp[guard - d:guard - d + Rc, :]      # hsum[r - d]
                    down = vp[guard + d:guard + d + Rc, :]    # hsum[r + d]
                    vsum = vsum + jnp.where(rin >= d, up, 0.0)
                    vsum = vsum + jnp.where(rin < H - d, down, 0.0)

            o_ref[pl.ds(r0, Rc), :] = (vsum * inv).astype(o_ref.dtype)

        if n_chunks == 1:
            process(0)
        else:
            @pl.loop(0, n_chunks)
            def _(c):
                r0 = c * Rc
                if Rc % 8 == 0:
                    r0 = pl.multiple_of(r0, 8)
                process(r0)

    return kernel


def _sublane_multiple(dtype):
    return {4: 8, 2: 16, 1: 32}.get(jnp.dtype(dtype).itemsize, 8)


def _choose_images_per_block(NC, H, W, dtype):
    """Images per grid block: ~4 MiB blocks, >= min(NC, 8) grid steps, and a block
    sublane extent (tb*H) that is a multiple of the dtype's min sublane tile."""
    itemsize = jnp.dtype(dtype).itemsize
    mult = _sublane_multiple(dtype)
    per_img_bytes = H * W * itemsize
    tb = max(1, _BLOCK_TARGET_BYTES // per_img_bytes)
    tb = min(tb, max(1, NC // _MIN_GRID_STEPS))
    s = mult // math.gcd(H, mult)
    tb = max(s, (tb // s) * s)
    if tb >= NC:
        tb = NC                      # full-array block is always a legal tiling
    return tb


def _choose_images_per_chunk(tb, H, W):
    """Whole-image chunks that tile the block exactly, ~_CHUNK_ELEMS elements each."""
    ipc = max(1, min(_CHUNK_ELEMS // (H * W), tb))
    while tb % ipc != 0:
        ipc -= 1
    return ipc


def avgpool2d_same(x, k=KERNEL_SIZE, images_per_block=None):
    """AvgPool2d(kernel_size=k, stride=1, padding=(k-1)//2, count_include_pad=True), NCHW."""
    N, C, H, W = x.shape
    NC = N * C
    pad = (k - 1) // 2

    tb = (images_per_block if images_per_block is not None
          else _choose_images_per_block(NC, H, W, x.dtype))
    tb = max(1, min(tb, NC))
    ipc = _choose_images_per_chunk(tb, H, W)
    R, Rc = tb * H, ipc * H
    n_chunks = tb // ipc
    assert R % H == 0 and Rc % H == 0  # every block/chunk starts at an image boundary

    # Roll fast path only for lane-aligned widths / sublane-aligned chunks;
    # otherwise the verified matmul-band + guarded-scratch fallback.
    roll_h = (W % 128 == 0)
    roll_v = roll_h and (Rc % 8 == 0)

    x2 = x.reshape(NC * H, W)          # pure metadata reshape, no data movement

    args, in_specs = [], []
    band_bytes = 0
    if not roll_h:
        band_dtype = jnp.bfloat16 if x.dtype == jnp.bfloat16 else jnp.float32
        idx = jnp.arange(W, dtype=jnp.int32)
        band = (jnp.abs(idx[:, None] - idx[None, :]) <= pad).astype(band_dtype)
        args.append(band)
        in_specs.append(pl.BlockSpec((W, W), lambda i: (0, 0)))  # resident, fetched once
        band_bytes = W * W * band.dtype.itemsize
    args.append(x2)
    in_specs.append(pl.BlockSpec((R, W), lambda i: (i, 0)))

    scratch_shapes = []
    scratch_bytes = 0
    if not roll_v:
        scratch_shapes.append(pltpu.VMEM((Rc + 2 * _GUARD, W), jnp.float32))
        scratch_bytes = (Rc + 2 * _GUARD) * W * 4

    block_bytes = R * W * x.dtype.itemsize
    vmem_need = 4 * block_bytes + 2 * band_bytes + scratch_bytes + (2 << 20)
    vmem_limit = int(max(32 << 20, min(vmem_need, 96 << 20)))

    kernel = _make_avgpool_kernel(H, W, k, ipc, n_chunks, roll_h, roll_v, _GUARD)

    out2 = pl.pallas_call(
        kernel,
        out_shape=jax.ShapeDtypeStruct((NC * H, W), x.dtype),
        grid_spec=pltpu.PrefetchScalarGridSpec(
            num_scalar_prefetch=0,
            grid=(pl.cdiv(NC, tb),),
            in_specs=in_specs,
            out_specs=pl.BlockSpec((R, W), lambda i: (i, 0)),
            scratch_shapes=scratch_shapes,
        ),
        compiler_params=pltpu.CompilerParams(
            dimension_semantics=("parallel",),
            vmem_limit_bytes=vmem_limit,
        ),
    )(*args)

    return out2.reshape(N, C, H, W)


def filter_low(img, recursions=RECURSIONS, images_per_block=None):
    """FilterLow.forward: apply the low-pass (avg-pool) filter `recursions` times."""
    for _ in range(recursions):
        img = avgpool2d_same(img, images_per_block=images_per_block)
    return img


def _reference(img, recursions=1):
    """Pure-JAX reference: AvgPool2d(5, stride=1, pad=2, count_include_pad=True)."""
    out = img.astype(jnp.float32)
    for _ in range(recursions):
        out = lax.reduce_window(
            out, 0.0, lax.add,
            window_dimensions=(1, 1, KERNEL_SIZE, KERNEL_SIZE),
            window_strides=(1, 1, 1, 1),
            padding=((0, 0), (0, 0), (PAD, PAD), (PAD, PAD)),
        ) / float(KERNEL_SIZE * KERNEL_SIZE)
    return out


if __name__ == "__main__":
    key = jax.random.PRNGKey(0)
    keys = jax.random.split(key, 8)

    def run_case(x, *, tol, recursions=1, images_per_block=None):
        fn = jax.jit(functools.partial(filter_low, recursions=recursions,
                                       images_per_block=images_per_block))
        y = jax.block_until_ready(fn(x))
        y_ref = _reference(x, recursions=recursions)
        assert y.shape == x.shape and y.dtype == x.dtype
        assert jnp.allclose(y.astype(jnp.float32), y_ref, atol=tol, rtol=tol), (
            float(jnp.max(jnp.abs(y.astype(jnp.float32) - y_ref))))

    # Default FilterLow config on the canonical small demo shape.
    run_case(jax.random.normal(keys[0], (2, 4, 16, 16), jnp.float32), tol=1e-5)
    # recursions=2 (the FilterLow loop).
    run_case(jax.random.normal(keys[1], (2, 4, 16, 16), jnp.float32), tol=1e-5,
             recursions=2)
    # Partial last grid block: NC=6 not divisible by images_per_block=4.
    run_case(jax.random.normal(keys[2], (1, 6, 16, 16), jnp.float32), tol=1e-5,
             images_per_block=4)
    # Non-power-of-two H (exercises the float floor-div row-index path).
    run_case(jax.random.normal(keys[3], (1, 4, 12, 24), jnp.float32), tol=1e-5)
    # Multi-chunk in-kernel loop (block = 8 images, chunk = 4 images).
    run_case(jax.random.normal(keys[4], (8, 8, 64, 64), jnp.float32), tol=1e-5)
    # bf16 input: bf16 operands feed the MXU, accumulation stays in f32.
    run_case(jax.random.normal(keys[5], (2, 4, 16, 16), jnp.float32).astype(jnp.bfloat16),
             tol=2e-2)

    print("KERNEL_OK")
</pallas_src>

<mosaic_0001>
module attributes {stable_mosaic.version = 11 : i64} {
  func.func @kernel(%arg0: i32, %arg1: memref<16x16xf32, #tpu.memory_space<vmem>>, %arg2: memref<16x16xf32, #tpu.memory_space<vmem>>, %arg3: memref<16x16xf32, #tpu.memory_space<vmem>>, %arg4: memref<32x16xf32, #tpu.memory_space<vmem>>) attributes {dimension_semantics = [#tpu.dimension_semantics<parallel>], iteration_bounds = array<i64: 8>, scalar_prefetch = 0 : i64, scratch_operands = 1 : i64, tpu.core_type = #tpu.core_type<tc>, window_params = [{pipeline_mode = #tpu.pipeline_mode<synchronous>, transform_indices = @transform_0, window_bounds = array<i64: 16, 16>}, {transform_indices = @transform_1, window_bounds = array<i64: 16, 16>}, {transform_indices = @transform_2, window_bounds = array<i64: 16, 16>}]} {
    %c0 = arith.constant 0 : index
    %c0_0 = arith.constant 0 : index
    %0 = vector.load %arg2[%c0, %c0_0] : memref<16x16xf32, #tpu.memory_space<vmem>>, vector<16x16xf32>
    %c0_1 = arith.constant 0 : index
    %c0_2 = arith.constant 0 : index
    %1 = vector.load %arg1[%c0_1, %c0_2] : memref<16x16xf32, #tpu.memory_space<vmem>>, vector<16x16xf32>
    %cst = arith.constant dense<0.000000e+00> : vector<16x16xf32>
    %2 = tpu.matmul %0, %1, %cst {dimension_numbers = #tpu.dot_dimension_numbers<[1], [0], [0], [1], [0, 0, 1, 1], [], []>} : vector<16x16xf32>, vector<16x16xf32>, vector<16x16xf32> -> vector<16x16xf32>
    %3 = tpu.iota {dimensions = array<i32: 0>} : vector<16x16xi32>
    %c8 = arith.constant 8 : index
    %c0_3 = arith.constant 0 : index
    %4 = vector.load %arg4[%c8, %c0_3] : memref<32x16xf32, #tpu.memory_space<vmem>>, vector<16x16xf32>
    tpu.vector_store %arg4[%c8, %c0_3], %2 {strides = array<i32>} : memref<32x16xf32, #tpu.memory_space<vmem>>, vector<16x16xf32>,
    %c0_4 = arith.constant 0 : index
    %c0_5 = arith.constant 0 : index
    %5 = vector.load %arg4[%c0_4, %c0_5] : memref<32x16xf32, #tpu.memory_space<vmem>>, vector<32x16xf32>
    %6 = vector.extract_strided_slice %5 {offsets = [7, 0], sizes = [16, 16], strides = [1, 1]} : vector<32x16xf32> to vector<16x16xf32>
    %7 = vector.extract_strided_slice %5 {offsets = [9, 0], sizes = [16, 16], strides = [1, 1]} : vector<32x16xf32> to vector<16x16xf32>
    %c1_i32 = arith.constant 1 : i32
    %8 = vector.broadcast %c1_i32 : i32 to vector<16x16xi32>
    %9 = arith.cmpi sge, %3, %8 : vector<16x16xi32>
    %cst_6 = arith.constant 0.000000e+00 : f32
    %10 = vector.broadcast %cst_6 : f32 to vector<16x16xf32>
    %11 = arith.select %9, %6, %10 : vector<16x16xi1>, vector<16x16xf32>
    %12 = arith.addf %2, %11 : vector<16x16xf32>
    %c15_i32 = arith.constant 15 : i32
    %13 = vector.broadcast %c15_i32 : i32 to vector<16x16xi32>
    %14 = arith.cmpi slt, %3, %13 : vector<16x16xi32>
    %cst_7 = arith.constant 0.000000e+00 : f32
    %15 = vector.broadcast %cst_7 : f32 to vector<16x16xf32>
    %16 = arith.select %14, %7, %15 : vector<16x16xi1>, vector<16x16xf32>
    %17 = arith.addf %12, %16 : vector<16x16xf32>
    %18 = vector.extract_strided_slice %5 {offsets = [6, 0], sizes = [16, 16], strides = [1, 1]} : vector<32x16xf32> to vector<16x16xf32>
    %19 = vector.extract_strided_slice %5 {offsets = [10, 0], sizes = [16, 16], strides = [1, 1]} : vector<32x16xf32> to vector<16x16xf32>
    %c2_i32 = arith.constant 2 : i32
    %20 = vector.broadcast %c2_i32 : i32 to vector<16x16xi32>
    %21 = arith.cmpi sge, %3, %20 : vector<16x16xi32>
    %cst_8 = arith.constant 0.000000e+00 : f32
    %22 = vector.broadcast %cst_8 : f32 to vector<16x16xf32>
    %23 = arith.select %21, %18, %22 : vector<16x16xi1>, vector<16x16xf32>
    %24 = arith.addf %17, %23 : vector<16x16xf32>
    %c14_i32 = arith.constant 14 : i32
    %25 = vector.broadcast %c14_i32 : i32 to vector<16x16xi32>
    %26 = arith.cmpi slt, %3, %25 : vector<16x16xi32>
    %cst_9 = arith.constant 0.000000e+00 : f32
    %27 = vector.broadcast %cst_9 : f32 to vector<16x16xf32>
    %28 = arith.select %26, %19, %27 : vector<16x16xi1>, vector<16x16xf32>
    %29 = arith.addf %24, %28 : vector<16x16xf32>
    %cst_10 = arith.constant 4.000000e-02 : f32
    %30 = vector.broadcast %cst_10 : f32 to vector<16x16xf32>
    %31 = arith.mulf %29, %30 : vector<16x16xf32>
    %c0_11 = arith.constant 0 : index
    %c0_12 = arith.constant 0 : index
    %32 = vector.load %arg3[%c0_11, %c0_12] : memref<16x16xf32, #tpu.memory_space<vmem>>, vector<16x16xf32>
    tpu.vector_store %arg3[%c0_11, %c0_12], %31 {strides = array<i32>} : memref<16x16xf32, #tpu.memory_space<vmem>>, vector<16x16xf32>,
    return
  }
  func.func @transform_0(%arg0: i32) -> (i32, i32) {
    %c0_i32 = arith.constant 0 : i32
    %c0_i32_0 = arith.constant 0 : i32
    %c0_i32_1 = arith.constant 0 : i32
    return %c0_i32, %c0_i32_0 : i32, i32
  }
  func.func @transform_1(%arg0: i32) -> (i32, i32) {
    %c0_i32 = arith.constant 0 : i32
    %c0_i32_0 = arith.constant 0 : i32
    return %arg0, %c0_i32 : i32, i32
  }
  func.func @transform_2(%arg0: i32) -> (i32, i32) {
    %c0_i32 = arith.constant 0 : i32
    %c0_i32_0 = arith.constant 0 : i32
    return %arg0, %c0_i32 : i32, i32
  }
}

</mosaic_0001>

<llo_original>
// kernel: filter_low.1
$region0: #{filter_low.1}
  #allocation0 [shape = 'u32[]', space=smem, size = 0x4, offset = 0x4, fixed_abs, tag = 'smem constant byte address 0x4 - core index']
  #allocation1 [shape = 'u32[144,128]{1,0:T(1,128)}', space=vmem, size = 0x12000, scoped, tag = 'internal scratch']
  #allocation2 [shape = 'f32[32,16]{1,0:T(8,128)}', space=vmem, size = 0x4000, scoped, tag = 'scratch operand']
  %s0 = inlined_call_operand.vmem [shape: f32[16,16], index: 0, kind: input, shape index: {}]
  %s1 = inlined_call_operand.hbm [shape: f32[128,16], index: 1, kind: input, shape index: {}]
  %s2 = inlined_call_operand.hbm [shape: f32[128,16], index: 2, kind: output, shape index: {}]
  %s3 = sld [smem:[#allocation0]]
  $region45: #{filter_low.1} parent=0
    _
  %s5 = ssub.s32 1, %s3
  %s6 = scalar_select 0, %s5, %s3
  $region1: #{filter_low.1} parent=0
    #allocation3 [shape = 'u8[16384]{0}', space=vmem, size = 0x4000, scoped, tag = 'input window, operand 1']
    #allocation4 [shape = 's32[2]{0}', space=sflag, size = 0x8, scoped, tag = 'scoped memory for filter_low.1']
    #allocation5 [shape = 's32[2]{0}', space=sflag, size = 0x8, scoped, tag = 'scoped memory for filter_low.1']
    #allocation6 [shape = 'u8[16384]{0}', space=vmem, size = 0x4000, scoped, tag = 'output window, operand 0']
    %7 = vsyncpa [#allocation4], 0
    %s8 = scalar_lea.sflag [#allocation4], 1
    %9 = vsyncpa %s8, 0
    %10 = vsyncpa [#allocation5], 0
    %s11 = scalar_lea.sflag [#allocation5], 1
    %12 = vsyncpa %s11, 0
    loop: start=0, step=1, limit=10
    $region2: #{filter_low.1} parent=1 // loop_pre_header
      _
    $region3: #{filter_low.1} parent=1 // loop_header
      %s14 = sphi 0, %s18
      %p15 = scmp.ge.s32.totalorder %s14, 10
      %s22 = sphi 0, %s22
      %s24 = sphi 0, %s22
      %s25 = sphi 0, %s24
      %s39 = sphi 0, %s25
      %s45 = sphi 0, %s47
      %s48 = sphi 0, %s45
      %s49 = sphi 0, %s48
      %s65 = sphi 0, %s49
      %s71 = sphi 0, %s73
      %s74 = sphi 0, %s71
      %s75 = sphi 0, %s74
      %s91 = sphi 0, %s75
    $region4: #{filter_low.1} parent=1 // loop_header_branch
      %17 = sbr.rel (%p15) target = $region8
    $region5: #{filter_low.1} parent=1 // loop_body
      %s19 = ssub.s32 %s14, 1
      %s20 = ssub.s32 %s14, 2
      %s21 = sadd.s32 %s14, 1
      %s23 = sadd.s32 %s22, 1
      %p26 = scmp.eq.s32.totalorder %s14, 7
      %p27 = scmp.ne.s32.totalorder %s22, %s24
      %p28 = scmp.eq.s32.totalorder %s14, 0
      %p29 = por %p27, %p28
      %p30 = scmp.ne.s32.totalorder %s22, %s24
      %p31 = scmp.eq.s32.totalorder %s19, 7
      %p32 = por %p30, %p31
      %p33 = scmp.ne.s32.totalorder %s24, %s25
      %p34 = scmp.eq.s32.totalorder %s19, 0
      %p35 = por %p33, %p34
      %p36 = scmp.ne.s32.totalorder %s24, %s25
      %p37 = scmp.eq.s32.totalorder %s20, 7
      %p38 = por %p36, %p37
      %p40 = scmp.ne.s32.totalorder %s25, %s39
      %p41 = scmp.eq.s32.totalorder %s20, 0
      %p42 = por %p40, %p41
      %s43 = ssub.s32 %s14, %s21
      %p44 = scmp.eq.s32.totalorder %s43, 0
      %s46 = sadd.s32 %s45, 1
      %s47 = scalar_select %p44, %s45, %s46
      %p50 = pneg %p44
      %p51 = scmp.eq.s32.totalorder %s14, 7
      %p52 = por %p50, %p51
      %p53 = scmp.ne.s32.totalorder %s45, %s48
      %p54 = scmp.eq.s32.totalorder %s14, 0
      %p55 = por %p53, %p54
      %p56 = scmp.ne.s32.totalorder %s45, %s48
      %p57 = scmp.eq.s32.totalorder %s19, 7
      %p58 = por %p56, %p57
      %p59 = scmp.ne.s32.totalorder %s48, %s49
      %p60 = scmp.eq.s32.totalorder %s19, 0
      %p61 = por %p59, %p60
      %p62 = scmp.ne.s32.totalorder %s48, %s49
      %p63 = scmp.eq.s32.totalorder %s20, 7
      %p64 = por %p62, %p63
      %p66 = scmp.ne.s32.totalorder %s49, %s65
      %p67 = scmp.eq.s32.totalorder %s20, 0
      %p68 = por %p66, %p67
      %s69 = ssub.s32 %s14, %s21
      %p70 = scmp.eq.s32.totalorder %s69, 0
      %s72 = sadd.s32 %s71, 1
      %s73 = scalar_select %p70, %s71, %s72
      %p76 = pneg %p70
      %p77 = scmp.eq.s32.totalorder %s14, 7
      %p78 = por %p76, %p77
      %p79 = scmp.ne.s32.totalorder %s71, %s74
      %p80 = scmp.eq.s32.totalorder %s14, 0
      %p81 = por %p79, %p80
      %p82 = scmp.ne.s32.totalorder %s71, %s74
      %p83 = scmp.eq.s32.totalorder %s19, 7
      %p84 = por %p82, %p83
      %p85 = scmp.ne.s32.totalorder %s74, %s75
      %p86 = scmp.eq.s32.totalorder %s19, 0
      %p87 = por %p85, %p86
      %p88 = scmp.ne.s32.totalorder %s74, %s75
      %p89 = scmp.eq.s32.totalorder %s20, 7
      %p90 = por %p88, %p89
      %p92 = scmp.ne.s32.totalorder %s75, %s91
      %p93 = scmp.eq.s32.totalorder %s20, 0
      %p94 = por %p92, %p93
      %p95 = scmp.le.s32.totalorder 1, %s14
      %p96 = scmp.lt.s32.totalorder %s14, 9
      %p97 = pnand %p95, %p96
      %p98 = pneg %p97
      // Predicated region
      $region9: #{filter_low.1} parent=5 // pred_check
        _
      $region10: #{filter_low.1} parent=5 // pred_check_branch
        %100 = sbr.rel (%p97) target = $region12
      $region11: #{filter_low.1} parent=5 // pred_region
        %s101 = ssub.s32 %s14, 1
        // Predicated region
        $region13: #{filter_low.1} parent=11 // pred_check
          %p102 = pneg %p35
        $region14: #{filter_low.1} parent=11 // pred_check_branch
          %104 = sbr.rel (%p102) target = $region16
        $region15: #{filter_low.1} parent=11 // pred_region
          _
        $region16: #{filter_low.1} parent=11 // pred_fallthru
          _
      $region12: #{filter_low.1} parent=5 // pred_fallthru
        _
      %p105 = scmp.lt.s32.totalorder %s14, 8
      // Predicated region
      $region17: #{filter_low.1} parent=5 // pred_check
        %p106 = pneg %p105
      $region18: #{filter_low.1} parent=5 // pred_check_branch
        %108 = sbr.rel (%p106) target = $region20
      $region19: #{filter_low.1} parent=5 // pred_region
        // Predicated region
        $region21: #{filter_low.1} parent=19 // pred_check
          %p109 = pneg %p55
        $region22: #{filter_low.1} parent=19 // pred_check_branch
          %111 = sbr.rel (%p109) target = $region24
        $region23: #{filter_low.1} parent=19 // pred_region
          %s112 = sand.u32 %s45, 1
          %s113 = scalar_lea.sflag [#allocation4], %s112
          %s114 = sand.u32 %s45, 1
          %s115 = smul.addr %s114, 16
          %s116 = scalar_lea.vmem [#allocation3], %s115
          %s117 = smul.u32 2, %s14
          %s119 = ssub.s32 256, 256
          %120 = vsyncadd %s113, %s119
          %s121 = smul.addr %s117, 128
          %s122 = scalar_lea.hbm %s1, %s121
          %s123 = sshll.u32 %s116, 4
          %s124 = int_to_ptr.vmem [resolvable:$true] %s123
          %129 = dma.hbm_to_vmem [thread:$0]  %s122, 256, %s124, %s113, 128, 128, 8
        $region24: #{filter_low.1} parent=19 // pred_fallthru
          _
      $region20: #{filter_low.1} parent=5 // pred_fallthru
        _
      %p130 = scmp.le.s32.totalorder 1, %s14
      %p131 = scmp.lt.s32.totalorder %s14, 9
      %p132 = pnand %p130, %p131
      %p133 = pneg %p132
      // Predicated region
      $region25: #{filter_low.1} parent=5 // pred_check
        _
      $region26: #{filter_low.1} parent=5 // pred_check_branch
        %135 = sbr.rel (%p132) target = $region28
      $region27: #{filter_low.1} parent=5 // pred_region
        %s136 = ssub.s32 %s14, 1
        %s137 = sand.u32 %s48, 1
        %s138 = scalar_lea.sflag [#allocation4], %s137
        %s139 = sand.u32 %s48, 1
        %s140 = smul.addr %s139, 16
        %s141 = scalar_lea.vmem [#allocation3], %s140
        // Predicated region
        $region29: #{filter_low.1} parent=27 // pred_check
          %p142 = pneg %p61
        $region30: #{filter_low.1} parent=27 // pred_check_branch
          %144 = sbr.rel (%p142) target = $region32
        $region31: #{filter_low.1} parent=27 // pred_region
          %145 = dma.done %s138, 256
        $region32: #{filter_low.1} parent=27 // pred_fallthru
          _
        %p146 = pneg %p35
        %p147 = pneg %p32
        %s148 = sand.u32 %s48, 1
        %s149 = scalar_lea.sflag [#allocation4], %s148
        %s150 = sand.u32 %s48, 1
        %s151 = smul.addr %s150, 16
        %s152 = scalar_lea.vmem [#allocation3], %s151
        %p153 = pneg %p61
        %p154 = pneg %p58
        %p155 = pneg %p87
        %p156 = pneg %p84
        %s157 = sand.u32 %s74, 1
        %s158 = scalar_lea.sflag [#allocation5], %s157
        %s159 = sand.u32 %s74, 1
        %s160 = smul.addr %s159, 16
        %s161 = scalar_lea.vmem [#allocation6], %s160
        %s162 = smul.u32 2, %s19
        %s163 = smul.u32 2, %s19
        %v164 = vld [vmem:[%s141] sm:$0xff]
        %v165 = vld [vmem:[%s141 + $0x8] sm:$0xff]
        %v166 = vld [vmem:[%s0] sm:$0xff]
        %v167 = vld [vmem:[%s0 + $0x8] sm:$0xff]
        %vm168 = vcmask 130048
        %v170 = vsel %vm168, %v164, 0
        %v173 = vsel %vm168, %v165, 0
        %175 = vmatprep.subr.mxu0 0.0
        %176 = vmatpush1.msra.mxu0 %v166
        %177 = vmatprep.subr.mxu0 0.0
        %178 = vmatpush1.msra.mxu0 %v167
        %179 = vmatprep.subr.mxu0 0.0
        %180 = vmatpush1.msra.mxu0 0.0
        %181 = vmatprep.subr.mxu0 0.0
        %182 = vmatpush1.msra.mxu0 0.0
        %183 = vmatprep.subr.mxu0 0.0
        %184 = vmatpush1.msra.mxu0 0.0
        %185 = vmatprep.subr.mxu0 0.0
        %186 = vmatpush1.msra.mxu0 0.0
        %187 = vmatprep.subr.mxu0 0.0
        %188 = vmatpush1.msra.mxu0 0.0
        %189 = vmatprep.subr.mxu0 0.0
        %190 = vmatpush1.msra.mxu0 0.0
        %191 = vmatprep.subr.mxu0 0.0
        %192 = vmatpush1.msra.mxu0 0.0
        %193 = vmatprep.subr.mxu0 0.0
        %194 = vmatpush1.msra.mxu0 0.0
        %195 = vmatprep.subr.mxu0 0.0
        %196 = vmatpush1.msra.mxu0 0.0
        %197 = vmatprep.subr.mxu0 0.0
        %198 = vmatpush1.msra.mxu0 0.0
        %199 = vmatprep.subr.mxu0 0.0
        %200 = vmatpush1.msra.mxu0 0.0
        %201 = vmatprep.subr.mxu0 0.0
        %202 = vmatpush1.msra.mxu0 0.0
        %203 = vmatprep.subr.mxu0 0.0
        %204 = vmatpush1.msra.mxu0 0.0
        %205 = vmatprep.subr.mxu0 0.0
        %206 = vmatpush1.msra.mxu0 0.0
        %207 = vmatprep.subr.mxu0 0.0
        %208 = vmatpush1.msra.mxu0 0.0
        %209 = vmatprep.subr.mxu0 0.0
        %210 = vmatpush1.msra.mxu0 0.0
        %211 = vmatprep.subr.mxu0 0.0
        %212 = vmatpush1.msra.mxu0 0.0
        %213 = vmatprep.subr.mxu0 0.0
        %214 = vmatpush1.msra.mxu0 0.0
        %215 = vmatprep.subr.mxu0 0.0
        %216 = vmatpush1.msra.mxu0 0.0
        %217 = vmatprep.subr.mxu0 0.0
        %218 = vmatpush1.msra.mxu0 0.0
        %219 = vmatprep.subr.mxu0 0.0
        %220 = vmatpush1.msra.mxu0 0.0
        %221 = vmatprep.subr.mxu0 0.0
        %222 = vmatpush1.msra.mxu0 0.0
        %223 = vmatprep.subr.mxu0 0.0
        %224 = vmatpush1.msra.mxu0 0.0
        %225 = vmatprep.subr.mxu0 0.0
        %226 = vmatpush1.msra.mxu0 0.0
        %227 = vmatprep.subr.mxu0 0.0
        %228 = vmatpush1.msra.mxu0 0.0
        %229 = vmatprep.subr.mxu0 0.0
        %230 = vmatpush1.msra.mxu0 0.0
        %231 = vmatprep.subr.mxu0 0.0
        %232 = vmatpush1.msra.mxu0 0.0
        %233 = vmatprep.subr.mxu0 0.0
        %234 = vmatpush1.msra.mxu0 0.0
        %235 = vmatprep.subr.mxu0 0.0
        %236 = vmatpush1.msra.mxu0 0.0
        %237 = vmatprep.subr.mxu0 0.0
        %238 = vmatpush1.msra.mxu0 0.0
        %239 = vmatprep.mubr.f32.mxu0 0.0
        %240 = vmatmul.mubr.f32.gmra.mrb[0].mxu0 %v170
        %v241 = vpop.f32.mrb[0].mxu0
        %v242 = vadd.f32 0.0, %v241
        %v243 = vpop.f32.mrb[0].mxu0
        %244 = vmatprep.mubr.f32.mxu0 0.0
        %245 = vmatmul.mubr.f32.gmra.mrb[0].mxu0 %v173
        %v246 = vpop.f32.mrb[0].mxu0
        %v247 = vadd.f32 0.0, %v246
        %v248 = vpop.f32.mrb[0].mxu0
        %249 = vdwg.mxu0
        %v250 = vlaneseq
        %v251 = vshrl.u32 %v250, 7
        %v252 = vadd.s32 %v251, 8
        %253 = vst.msk [vmem:[#allocation2 + $0x8] sm:$0xff] %vm168, %v242
        %254 = vst.msk [vmem:[#allocation2 + $0x10] sm:$0xff] %vm168, %v247
        %v255 = vld [vmem:[#allocation2] sm:$0xff]
        %v256 = vld [vmem:[#allocation2 + $0x8] sm:$0xff]
        %v257 = vld [vmem:[#allocation2 + $0x10] sm:$0xff]
        %v258 = vld [vmem:[#allocation2 + $0x18] sm:$0xff]
        %vm259 = vcmp.ge.s32.totalorder %v251, 1
        %vm260 = vcmp.ge.s32.totalorder %v252, 1
        %vm264 = vcmask 1040384
        %v265 = vrot.slane %v255, 7
        %v266 = vrot.slane %v256, 7
        %v267 = vsel %vm264, %v265, %v266
        %v268 = vrot.slane %v257, 7
        %v269 = vsel %vm264, %v266, %v268
        %v272 = vsel %vm259, %v267, 0.0
        %v273 = vsel %vm260, %v269, 0.0
        %v274 = vadd.f32 %v242, %v272
        %v275 = vadd.f32 %v247, %v273
        %vm276 = vcmp.lt.s32.totalorder %v251, 15
        %vm277 = vcmp.lt.s32.totalorder %v252, 15
        %vm279 = vcmask 1046528
        %v280 = vrot.slane %v256, 1
        %v281 = vrot.slane %v257, 1
        %v282 = vsel %vm279, %v280, %v281
        %v283 = vrot.slane %v258, 1
        %v284 = vsel %vm279, %v281, %v283
        %v287 = vsel %vm276, %v282, 0.0
        %v288 = vsel %vm277, %v284, 0.0
        %v289 = vadd.f32 %v274, %v287
        %v290 = vadd.f32 %v275, %v288
        %vm291 = vcmp.ge.s32.totalorder %v251, 2
        %vm292 = vcmp.ge.s32.totalorder %v252, 2
        %vm293 = vcmask 1041408
        %v294 = vrot.slane %v255, 6
        %v295 = vrot.slane %v256, 6
        %v296 = vsel %vm293, %v294, %v295
        %v297 = vrot.slane %v257, 6
        %v298 = vsel %vm293, %v295, %v297
        %v301 = vsel %vm291, %v296, 0.0
        %v302 = vsel %vm292, %v298, 0.0
        %v303 = vadd.f32 %v289, %v301
        %v304 = vadd.f32 %v290, %v302
        %vm305 = vcmp.lt.s32.totalorder %v251, 14
        %vm306 = vcmp.lt.s32.totalorder %v252, 14
        %vm307 = vcmask 1045504
        %v308 = vrot.slane %v256, 2
        %v309 = vrot.slane %v257, 2
        %v310 = vsel %vm307, %v308, %v309
        %v311 = vrot.slane %v258, 2
        %v312 = vsel %vm307, %v309, %v311
        %v315 = vsel %vm305, %v310, 0.0
        %v316 = vsel %vm306, %v312, 0.0
        %v317 = vadd.f32 %v303, %v315
        %v318 = vadd.f32 %v304, %v316
        %v319 = vmul.f32 %v317, 0.04
        %v320 = vmul.f32 %v318, 0.04
        %321 = vst.msk [vmem:[%s161] sm:$0xff] %vm168, %v319
        %322 = vst.msk [vmem:[%s161 + $0x8] sm:$0xff] %vm168, %v320
        %s323 = sand.u32 %s74, 1
        %s324 = scalar_lea.sflag [#allocation5], %s323
        %s325 = sand.u32 %s74, 1
        %s326 = smul.addr %s325, 16
        %s327 = scalar_lea.vmem [#allocation6], %s326
        // Predicated region
        $region33: #{filter_low.1} parent=27 // pred_check
          %p328 = pneg %p84
        $region34: #{filter_low.1} parent=27 // pred_check_branch
          %330 = sbr.rel (%p328) target = $region36
        $region35: #{filter_low.1} parent=27 // pred_region
          %s331 = smul.u32 2, %s19
          %s333 = ssub.s32 256, 256
          %334 = vsyncadd %s324, %s333
          %s335 = smul.addr %s331, 128
          %s336 = scalar_lea.hbm %s2, %s335
          %s337 = sshll.u32 %s327, 4
          %s338 = int_to_ptr.vmem [resolvable:$true] %s337
          %343 = dma.vmem_to_hbm [thread:$0]  %s338, 256, %s336, %s324, 128, 128, 8
        $region36: #{filter_low.1} parent=27 // pred_fallthru
          _
      $region28: #{filter_low.1} parent=5 // pred_fallthru
        _
      %p344 = scmp.le.s32.totalorder 2, %s14
      // Predicated region
      $region37: #{filter_low.1} parent=5 // pred_check
        %p345 = pneg %p344
      $region38: #{filter_low.1} parent=5 // pred_check_branch
        %347 = sbr.rel (%p345) target = $region40
      $region39: #{filter_low.1} parent=5 // pred_region
        %s348 = ssub.s32 %s14, 2
        // Predicated region
        $region41: #{filter_low.1} parent=39 // pred_check
          %p349 = pneg %p90
        $region42: #{filter_low.1} parent=39 // pred_check_branch
          %351 = sbr.rel (%p349) target = $region44
        $region43: #{filter_low.1} parent=39 // pred_region
          %s352 = sand.u32 %s75, 1
          %s353 = scalar_lea.sflag [#allocation5], %s352
          %s354 = sand.u32 %s75, 1
          %s355 = smul.addr %s354, 16
          %s356 = scalar_lea.vmem [#allocation6], %s355
          %357 = dma.done %s353, 256
        $region44: #{filter_low.1} parent=39 // pred_fallthru
          _
      $region40: #{filter_low.1} parent=5 // pred_fallthru
        _
    $region6: #{filter_low.1} parent=1 // loop_footer
      %s18 = sadd.s32 1, %s14
    $region7: #{filter_low.1} parent=1 // loop_footer_branch
      %13 = sbr.rel target = $region3
    $region8: #{filter_low.1} parent=1 // loop_exit
      _
    %358 = vsyncpa [#allocation4], 1
    %s359 = scalar_lea.sflag [#allocation4], 1
    %360 = vsyncpa %s359, 1
    %361 = vsyncpa [#allocation5], 1
    %s362 = scalar_lea.sflag [#allocation5], 1
    %363 = vsyncpa %s362, 1

</llo_original>
